<compile_context>
chip_gen: v5e
topology: v5e:2x2
jax: 0.10.0
libtpu: 0.0.40
codegen_flags: <defaults>
</compile_context>

<pallas_src>
import jax
import jax.numpy as jnp
from jax import lax
from jax.experimental import pallas as pl
from jax.experimental.pallas import tpu as pltpu

_MIB = 1024 * 1024


def _round_up(v, m):
    return ((v + m - 1) // m) * m


def _tpu_info():
    """Best-effort chip query; falls back to conservative defaults."""
    vmem_bytes = 128 * _MIB
    try:
        info = pltpu.get_tpu_info()
        vmem_bytes = int(getattr(info, "vmem_capacity_bytes", vmem_bytes))
    except Exception:
        pass
    # v7x: 64 MiB VMEM per TensorCore and 2 TCs/chip; v5e/v6e: 128 MiB, 1 TC.
    two_cores = vmem_bytes <= 96 * _MIB
    return vmem_bytes, two_cores


# ----------------------------- kernels ------------------------------------- #

def _batch_row(batch_ref, n):
    # Resident layout: [n_node_tiles, tn] -> slice row n.
    # Per-tile layout: [1, tn] (BlockSpec already selected tile n) -> row 0.
    row = n if batch_ref.shape[0] > 1 else 0
    return batch_ref[pl.ds(row, 1), :]                       # [1, TN] int32


def _mean_pool_kernel(batch_ref, x_ref, out_ref, acc_ref, cnt_ref):
    # batch_ref: resident [N_tiles, TN] (or [1, TN]) int32, padded nodes = -1
    # x_ref:     [TN, TF]
    # out_ref:   [B, TF]
    # acc_ref:   [B, TF] f32 scratch (persists across the N grid axis)
    # cnt_ref:   [B, 1]  f32 scratch
    n = pl.program_id(1)

    @pl.when(n == 0)
    def _init():
        acc_ref[...] = jnp.zeros_like(acc_ref)
        cnt_ref[...] = jnp.zeros_like(cnt_ref)

    B = acc_ref.shape[0]
    b = _batch_row(batch_ref, n)                                  # [1, TN]
    gids = lax.broadcasted_iota(jnp.int32, (B, b.shape[1]), 0)    # [B, TN]
    mask = gids == b                                              # [B, TN]
    onehot = mask.astype(x_ref.dtype)                             # MXU operand in x dtype
    acc_ref[...] += jnp.dot(onehot, x_ref[...],
                            preferred_element_type=jnp.float32)   # [B, TF]
    cnt_ref[...] += jnp.sum(mask.astype(jnp.float32), axis=-1, keepdims=True)

    @pl.when(n == pl.num_programs(1) - 1)
    def _finalize():
        cnt = jnp.maximum(cnt_ref[...], 1.0)
        inv = pl.reciprocal(cnt, approx=True)      # EUP slot
        inv = inv * (2.0 - cnt * inv)              # one Newton step -> ~f32 accuracy
        out_ref[...] = (acc_ref[...] * inv).astype(out_ref.dtype)


def _sum_pool_kernel(batch_ref, x_ref, out_ref, acc_ref):
    n = pl.program_id(1)

    @pl.when(n == 0)
    def _init():
        acc_ref[...] = jnp.zeros_like(acc_ref)

    B = acc_ref.shape[0]
    b = _batch_row(batch_ref, n)
    gids = lax.broadcasted_iota(jnp.int32, (B, b.shape[1]), 0)
    onehot = (gids == b).astype(x_ref.dtype)
    acc_ref[...] += jnp.dot(onehot, x_ref[...],
                            preferred_element_type=jnp.float32)

    @pl.when(n == pl.num_programs(1) - 1)
    def _finalize():
        out_ref[...] = acc_ref[...].astype(out_ref.dtype)


def _max_pool_kernel(batch_ref, x_ref, out_ref, acc_ref):
    # grid = (graph_blocks, F_tiles, N_tiles); TB = 8 graphs per block so the
    # masked-select temporary is [8, TN, TF] regardless of num_graphs.
    n = pl.program_id(2)

    @pl.when(n == 0)
    def _init():
        acc_ref[...] = jnp.full_like(acc_ref, -jnp.inf)

    TB = acc_ref.shape[0]                                           # 8
    b = _batch_row(batch_ref, n)                                    # [1, TN]
    g0 = pl.program_id(0) * TB
    gids = g0 + lax.broadcasted_iota(jnp.int32, (TB, b.shape[1]), 0)  # [TB, TN]
    mask = gids == b                                                # [TB, TN]
    x = x_ref[...]                                                  # x.dtype (no f32 upcast)
    neg = jnp.asarray(-jnp.inf, dtype=x.dtype)
    xm = jnp.where(mask[:, :, None], x[None, :, :], neg)            # [TB, TN, TF]
    acc_ref[...] = jnp.maximum(acc_ref[...],
                               jnp.max(xm, axis=1).astype(jnp.float32))

    @pl.when(n == pl.num_programs(2) - 1)
    def _finalize():
        out_ref[...] = acc_ref[...].astype(out_ref.dtype)


_POOL_TYPES = ("mean_pool", "sum_pool", "max_pool")


# ----------------------------- wrapper -------------------------------------- #

def _global_pool_pallas(x, batch, num_graphs, pool_type, *, tile_n=None, tile_f=None):
    assert pool_type in _POOL_TYPES
    N, F = x.shape
    itemsize = jnp.dtype(x.dtype).itemsize
    _, two_cores = _tpu_info()

    B_pad = max(_round_up(num_graphs, 8), 8)
    F_pad = max(_round_up(F, 128), 128)

    # ---- feature tile ------------------------------------------------------
    if tile_f is not None:
        tf = min(max(_round_up(tile_f, 128), 128), F_pad)
    elif two_cores and F_pad >= 256:
        # v7x: guarantee >= 2 parallel F tiles so both TensorCores get work.
        tf = _round_up((F_pad + 1) // 2, 128)
    else:
        # single-TC chips: full feature rows -> contiguous DMA, fewer grid
        # steps, batch/one-hot handled once per node tile.
        tf = F_pad
    F_pad = _round_up(F_pad, tf)

    # ---- node tile ---------------------------------------------------------
    # HBM-bound kernel: big x tiles amortize the ~0.35 us per-grid-step cost.
    target = (8 if two_cores else 4) * _MIB
    if pool_type == "max_pool":
        # bound the [8, TN, TF] masked-select temporary to ~4 MiB
        tn_cap = max((4 * _MIB) // (8 * tf * itemsize), 128)
    else:
        tn_cap = max(target // (tf * itemsize), 128)
    tn_cap = max((tn_cap // 128) * 128, 128)
    tn_req = tn_cap if tile_n is None else min(max(int(tile_n), 128), tn_cap)

    if N <= tn_req:
        tn = max(_round_up(N, 8), 8)
    else:
        tn = max((tn_req // 128) * 128, 128)

    def _layout(tn_):
        npad = _round_up(N, tn_)
        ntiles = npad // tn_
        resident = _round_up(ntiles, 8) * tn_ * 4
        return npad, ntiles, resident, resident <= 8 * _MIB

    def _est(tn_, resident, use_res):
        e = 2 * tn_ * tf * itemsize                           # x, double-buffered
        e += resident if use_res else 2 * 8 * tn_ * 4         # batch row(s)
        if pool_type == "max_pool":
            e += 2 * 8 * tf * itemsize + 8 * tf * 4           # out + acc
            e += 2 * 8 * tn_ * tf * itemsize                  # masked-select temp
        else:
            e += 2 * B_pad * tf * itemsize                    # out, double-buffered
            e += B_pad * tf * 4 + B_pad * 128 * 4             # acc + cnt
            e += B_pad * tn_ * itemsize                       # one-hot
        return e

    cap = (48 if two_cores else 100) * _MIB
    N_pad, n_node_tiles, resident, use_resident = _layout(tn)
    est = _est(tn, resident, use_resident)
    while est > cap - 8 * _MIB and tn > 128 and N_pad > tn:
        tn = max(((tn // 2) // 128) * 128, 128)
        N_pad, n_node_tiles, resident, use_resident = _layout(tn)
        est = _est(tn, resident, use_resident)
    vmem_limit = int(min(cap, max(est + 8 * _MIB, 32 * _MIB)))

    # ---- pad inputs (padded nodes get batch id -1: never match a graph) ----
    x_pad = jnp.pad(x, ((0, N_pad - N), (0, F_pad - F)))
    batch_flat = jnp.pad(batch.astype(jnp.int32), (0, N_pad - N), constant_values=-1)
    if use_resident:
        batch_arr = batch_flat.reshape(n_node_tiles, tn)
    else:
        batch_arr = batch_flat.reshape(1, N_pad)

    # ---- grid / specs ------------------------------------------------------
    if pool_type == "max_pool":
        grid = (B_pad // 8, F_pad // tf, N_pad // tn)
        dims = ("parallel", "parallel", "arbitrary")
        kernel = _max_pool_kernel
        out_block, out_idx = (8, tf), (lambda b, f, n: (b, f))
        x_idx = lambda b, f, n: (n, f)
        if use_resident:
            batch_spec = pl.BlockSpec((n_node_tiles, tn), lambda b, f, n: (0, 0))
        else:
            batch_spec = pl.BlockSpec((1, tn), lambda b, f, n: (0, n))
        scratch = [pltpu.VMEM((8, tf), jnp.float32)]
    else:
        grid = (F_pad // tf, N_pad // tn)
        dims = ("parallel", "arbitrary")
        kernel = _mean_pool_kernel if pool_type == "mean_pool" else _sum_pool_kernel
        out_block, out_idx = (B_pad, tf), (lambda f, n: (0, f))
        x_idx = lambda f, n: (n, f)
        if use_resident:
            batch_spec = pl.BlockSpec((n_node_tiles, tn), lambda f, n: (0, 0))
        else:
            batch_spec = pl.BlockSpec((1, tn), lambda f, n: (0, n))
        scratch = [pltpu.VMEM((B_pad, tf), jnp.float32)]
        if pool_type == "mean_pool":
            scratch.append(pltpu.VMEM((B_pad, 1), jnp.float32))

    out_pad = pl.pallas_call(
        kernel,
        out_shape=jax.ShapeDtypeStruct((B_pad, F_pad), x.dtype),
        grid_spec=pltpu.PrefetchScalarGridSpec(
            num_scalar_prefetch=0,
            grid=grid,
            in_specs=[batch_spec, pl.BlockSpec((tn, tf), x_idx)],
            out_specs=pl.BlockSpec(out_block, out_idx),
            scratch_shapes=scratch),
        compiler_params=pltpu.CompilerParams(
            dimension_semantics=dims,
            vmem_limit_bytes=vmem_limit),
    )(batch_arr, x_pad)

    return out_pad[:num_graphs, :F]


# ----------------------------- module wrapper ------------------------------ #

class Pool:
    """JAX/Pallas equivalent of pGRACE.model.Pool."""

    def __init__(self, in_channels, ratio=1.0, key=jax.random.PRNGKey(0)):
        self.in_channels = in_channels
        self.ratio = ratio
        # lin1: Linear(in_channels * 2, in_channels) — parameter parity only
        # (unused by the mean/max/sum forward paths of the original module).
        k_w, k_b, k_s = jax.random.split(key, 3)
        bound = 1.0 / jnp.sqrt(jnp.float32(in_channels * 2))
        self.lin1_w = jax.random.uniform(
            k_w, (in_channels, in_channels * 2), jnp.float32, -bound, bound)
        self.lin1_b = jax.random.uniform(
            k_b, (in_channels,), jnp.float32, -bound, bound)
        self.sag_score_w = jax.random.normal(k_s, (in_channels, 1), jnp.float32) * 0.1

    def __call__(self, x, edge, batch, type="mean_pool", num_graphs=None):
        if type == "sag_pool":
            # TODO(synk): SAGPooling needs sparse GNN message passing + top-k
            # node selection; no clean Pallas equivalent implemented here.
            raise NotImplementedError("sag_pool is not implemented")
        if type not in _POOL_TYPES:
            raise NotImplementedError(f"pool type '{type}' not implemented")
        if num_graphs is None:
            # Prefer passing num_graphs statically: this fallback forces a
            # device->host sync and cannot run under jax.jit.
            num_graphs = int(jax.device_get(jnp.max(batch))) + 1
        return _global_pool_pallas(x, batch, num_graphs, type)


# ----------------------------- reference (pure JAX) ------------------------ #

def _ref_pool(x, batch, num_graphs, pool_type):
    if pool_type == "mean_pool":
        s = jax.ops.segment_sum(x, batch, num_segments=num_graphs)
        c = jax.ops.segment_sum(jnp.ones((x.shape[0],), jnp.float32), batch,
                                num_segments=num_graphs)
        return s / jnp.maximum(c, 1.0)[:, None]
    if pool_type == "sum_pool":
        return jax.ops.segment_sum(x, batch, num_segments=num_graphs)
    if pool_type == "max_pool":
        return jax.ops.segment_max(x, batch, num_segments=num_graphs)
    raise ValueError(pool_type)


# ----------------------------- main ---------------------------------------- #

if __name__ == "__main__":
    key = jax.random.PRNGKey(0)
    edge = jnp.array([[0, 1, 2, 3, 4], [1, 2, 0, 4, 5]], dtype=jnp.int32)  # unused

    ok = True

    # Config 1: tiny, single-tile path (B=2 graphs, hidden=32, 8 nodes).
    k1, k2, key = jax.random.split(key, 3)
    x1 = jax.random.normal(k1, (8, 32), jnp.float32)
    batch1 = jnp.array([0, 0, 0, 1, 1, 1, 1, 1], dtype=jnp.int32)
    pool1 = Pool(32, ratio=1.0, key=k2)
    for t in _POOL_TYPES:
        out = jax.block_until_ready(pool1(x1, edge, batch1, type=t, num_graphs=2))
        ref = _ref_pool(x1, batch1, 2, t)
        if not jnp.allclose(out, ref, atol=1e-4, rtol=1e-4):
            ok = False
            print(f"MISMATCH in {t} (config 1)")

    # Config 2: exercises the tiled reduction over N (2 tiles) and the
    # tiled F axis (2 tiles): 200 nodes, 160 features, 3 graphs.
    k3, key = jax.random.split(key)
    x2 = jax.random.normal(k3, (200, 160), jnp.float32)
    batch2 = jnp.concatenate([
        jnp.zeros((70,), jnp.int32),
        jnp.ones((60,), jnp.int32),
        jnp.full((70,), 2, jnp.int32),
    ])
    for t in _POOL_TYPES:
        out = jax.block_until_ready(
            _global_pool_pallas(x2, batch2, 3, t, tile_n=128, tile_f=128))
        ref = _ref_pool(x2, batch2, 3, t)
        if not jnp.allclose(out, ref, atol=1e-4, rtol=1e-4):
            ok = False
            print(f"MISMATCH in {t} (config 2)")

    # Config 3: many graphs (12 -> B_pad=16 -> 2 graph blocks for max_pool)
    # straddling node-tile boundaries: 200 nodes, 32 features.
    k4, key = jax.random.split(key)
    x3 = jax.random.normal(k4, (200, 32), jnp.float32)
    counts = [17] * 8 + [16] * 4   # sums to 200
    batch3 = jnp.concatenate(
        [jnp.full((c,), g, jnp.int32) for g, c in enumerate(counts)])
    for t in _POOL_TYPES:
        out = jax.block_until_ready(
            _global_pool_pallas(x3, batch3, 12, t, tile_n=128, tile_f=128))
        ref = _ref_pool(x3, batch3, 12, t)
        if not jnp.allclose(out, ref, atol=1e-4, rtol=1e-4):
            ok = False
            print(f"MISMATCH in {t} (config 3)")

    if ok:
        print("KERNEL_OK")
</pallas_src>

<mosaic_0001>
module attributes {stable_mosaic.version = 11 : i64} {
  func.func @_mean_pool_kernel(%arg0: i32, %arg1: i32, %arg2: memref<1x8xi32, #tpu.memory_space<vmem>>, %arg3: memref<8x128xf32, #tpu.memory_space<vmem>>, %arg4: memref<8x128xf32, #tpu.memory_space<vmem>>, %arg5: memref<8x128xf32, #tpu.memory_space<vmem>>, %arg6: memref<8x1xf32, #tpu.memory_space<vmem>>) attributes {dimension_semantics = [#tpu.dimension_semantics<parallel>, #tpu.dimension_semantics<arbitrary>], iteration_bounds = array<i64: 1, 1>, scalar_prefetch = 0 : i64, scratch_operands = 2 : i64, tpu.core_type = #tpu.core_type<tc>, window_params = [{pipeline_mode = #tpu.pipeline_mode<synchronous>, transform_indices = @transform_0, window_bounds = array<i64: 1, 8>}, {transform_indices = @transform_1, window_bounds = array<i64: 8, 128>}, {transform_indices = @transform_2, window_bounds = array<i64: 8, 128>}]} {
    %c0_i32 = arith.constant 0 : i32
    %0 = arith.cmpi eq, %arg1, %c0_i32 : i32
    %1 = arith.extui %0 : i1 to i32
    %c0_i32_0 = arith.constant 0 : i32
    %2 = arith.cmpi ne, %1, %c0_i32_0 : i32
    scf.if %2 {
      %cst_15 = arith.constant 0.000000e+00 : f32
      %24 = vector.broadcast %cst_15 : f32 to vector<8x128xf32>
      %c0_16 = arith.constant 0 : index
      %c0_17 = arith.constant 0 : index
      %25 = vector.load %arg5[%c0_16, %c0_17] : memref<8x128xf32, #tpu.memory_space<vmem>>, vector<8x128xf32>
      tpu.vector_store %arg5[%c0_16, %c0_17], %24 {strides = array<i32>} : memref<8x128xf32, #tpu.memory_space<vmem>>, vector<8x128xf32>,
      %cst_18 = arith.constant 0.000000e+00 : f32
      %26 = vector.broadcast %cst_18 : f32 to vector<8x1xf32>
      %c0_19 = arith.constant 0 : index
      %c0_20 = arith.constant 0 : index
      %27 = vector.load %arg6[%c0_19, %c0_20] : memref<8x1xf32, #tpu.memory_space<vmem>>, vector<8x1xf32>
      tpu.vector_store %arg6[%c0_19, %c0_20], %26 {strides = array<i32>} : memref<8x1xf32, #tpu.memory_space<vmem>>, vector<8x1xf32>,
    } else {
    }
    %c0 = arith.constant 0 : index
    %c0_1 = arith.constant 0 : index
    %3 = vector.load %arg2[%c0, %c0_1] : memref<1x8xi32, #tpu.memory_space<vmem>>, vector<1x8xi32>
    %4 = tpu.iota {dimensions = array<i32: 0>} : vector<8x8xi32>
    %5 = vector.broadcast %3 : vector<1x8xi32> to vector<8x8xi32>
    %6 = arith.cmpi eq, %4, %5 : vector<8x8xi32>
    %7 = arith.extui %6 : vector<8x8xi1> to vector<8x8xi32>
    %8 = arith.sitofp %7 : vector<8x8xi32> to vector<8x8xf32>
    %c0_2 = arith.constant 0 : index
    %c0_3 = arith.constant 0 : index
    %9 = vector.load %arg5[%c0_2, %c0_3] : memref<8x128xf32, #tpu.memory_space<vmem>>, vector<8x128xf32>
    %c0_4 = arith.constant 0 : index
    %c0_5 = arith.constant 0 : index
    %10 = vector.load %arg3[%c0_4, %c0_5] : memref<8x128xf32, #tpu.memory_space<vmem>>, vector<8x128xf32>
    %cst = arith.constant dense<0.000000e+00> : vector<8x128xf32>
    %11 = tpu.matmul %8, %10, %cst {dimension_numbers = #tpu.dot_dimension_numbers<[1], [0], [0], [1], [0, 0, 1, 1], [], []>} : vector<8x8xf32>, vector<8x128xf32>, vector<8x128xf32> -> vector<8x128xf32>
    %12 = arith.addf %9, %11 : vector<8x128xf32>
    %c0_6 = arith.constant 0 : index
    %c0_7 = arith.constant 0 : index
    %13 = vector.load %arg5[%c0_6, %c0_7] : memref<8x128xf32, #tpu.memory_space<vmem>>, vector<8x128xf32>
    tpu.vector_store %arg5[%c0_6, %c0_7], %12 {strides = array<i32>} : memref<8x128xf32, #tpu.memory_space<vmem>>, vector<8x128xf32>,
    %c0_8 = arith.constant 0 : index
    %c0_9 = arith.constant 0 : index
    %14 = vector.load %arg6[%c0_8, %c0_9] : memref<8x1xf32, #tpu.memory_space<vmem>>, vector<8x1xf32>
    %15 = arith.extui %6 : vector<8x8xi1> to vector<8x8xi32>
    %16 = arith.sitofp %15 : vector<8x8xi32> to vector<8x8xf32>
    %cst_10 = arith.constant dense<0.000000e+00> : vector<8xf32>
    %17 = vector.multi_reduction <add>, %16, %cst_10 [1] : vector<8x8xf32> to vector<8xf32>
    %18 = vector.shape_cast %17 : vector<8xf32> to vector<8x1xf32>
    %19 = arith.addf %14, %18 : vector<8x1xf32>
    %c0_11 = arith.constant 0 : index
    %c0_12 = arith.constant 0 : index
    %20 = vector.load %arg6[%c0_11, %c0_12] : memref<8x1xf32, #tpu.memory_space<vmem>>, vector<8x1xf32>
    tpu.vector_store %arg6[%c0_11, %c0_12], %19 {strides = array<i32>} : memref<8x1xf32, #tpu.memory_space<vmem>>, vector<8x1xf32>,
    %c0_i32_13 = arith.constant 0 : i32
    %21 = arith.cmpi eq, %arg1, %c0_i32_13 : i32
    %22 = arith.extui %21 : i1 to i32
    %c0_i32_14 = arith.constant 0 : i32
    %23 = arith.cmpi ne, %22, %c0_i32_14 : i32
    scf.if %23 {
      %c0_15 = arith.constant 0 : index
      %c0_16 = arith.constant 0 : index
      %24 = vector.load %arg6[%c0_15, %c0_16] : memref<8x1xf32, #tpu.memory_space<vmem>>, vector<8x1xf32>
      %cst_17 = arith.constant 1.000000e+00 : f32
      %25 = vector.broadcast %cst_17 : f32 to vector<8x1xf32>
      %26 = arith.maximumf %24, %25 : vector<8x1xf32>
      %27 = tpu.reciprocal %26 {approx = true} : vector<8x1xf32> -> vector<8x1xf32>
      %28 = arith.mulf %26, %27 : vector<8x1xf32>
      %cst_18 = arith.constant 2.000000e+00 : f32
      %29 = vector.broadcast %cst_18 : f32 to vector<8x1xf32>
      %30 = arith.subf %29, %28 : vector<8x1xf32>
      %31 = arith.mulf %27, %30 : vector<8x1xf32>
      %c0_19 = arith.constant 0 : index
      %c0_20 = arith.constant 0 : index
      %32 = vector.load %arg5[%c0_19, %c0_20] : memref<8x128xf32, #tpu.memory_space<vmem>>, vector<8x128xf32>
      %33 = vector.broadcast %31 : vector<8x1xf32> to vector<8x128xf32>
      %34 = arith.mulf %32, %33 : vector<8x128xf32>
      %c0_21 = arith.constant 0 : index
      %c0_22 = arith.constant 0 : index
      %35 = vector.load %arg4[%c0_21, %c0_22] : memref<8x128xf32, #tpu.memory_space<vmem>>, vector<8x128xf32>
      tpu.vector_store %arg4[%c0_21, %c0_22], %34 {strides = array<i32>} : memref<8x128xf32, #tpu.memory_space<vmem>>, vector<8x128xf32>,
    } else {
    }
    return
  }
  func.func @transform_0(%arg0: i32, %arg1: i32) -> (i32, i32) {
    %c0_i32 = arith.constant 0 : i32
    %c0_i32_0 = arith.constant 0 : i32
    %c0_i32_1 = arith.constant 0 : i32
    return %c0_i32, %c0_i32_0 : i32, i32
  }
  func.func @transform_1(%arg0: i32, %arg1: i32) -> (i32, i32) {
    %c0_i32 = arith.constant 0 : i32
    return %arg1, %arg0 : i32, i32
  }
  func.func @transform_2(%arg0: i32, %arg1: i32) -> (i32, i32) {
    %c0_i32 = arith.constant 0 : i32
    %c0_i32_0 = arith.constant 0 : i32
    return %c0_i32, %arg0 : i32, i32
  }
}

</mosaic_0001>

<llo_original>
// kernel: tpu_custom_call.1
$region0: #{tpu_custom_call.1}
  #allocation0 [shape = 'u32[]', space=smem, size = 0x4, offset = 0x4, fixed_abs, tag = 'smem constant byte address 0x4 - core index']
  #allocation1 [shape = 'u32[72,128]{1,0:T(1,128)}', space=vmem, size = 0x9000, scoped, tag = 'internal scratch']
  #allocation2 [shape = 'f32[8,128]{1,0:T(8,128)}', space=vmem, size = 0x1000, scoped, tag = 'scratch operand']
  #allocation3 [shape = 'f32[8,1]{1,0:T(8,128)}', space=vmem, size = 0x1000, scoped, tag = 'scratch operand']
  %s0 = inlined_call_operand.hbm [shape: s32[1,8], index: 0, kind: input, shape index: {}]
  %s1 = inlined_call_operand.hbm [shape: f32[8,128], index: 1, kind: input, shape index: {}]
  %s2 = inlined_call_operand.hbm [shape: f32[8,128], index: 2, kind: output, shape index: {}]
  %s3 = sld [smem:[#allocation0]]
  $region34: #{tpu_custom_call.1} parent=0
    _
  %s5 = ssub.s32 1, %s3
  %s6 = scalar_select 0, %s5, %s3
  $region1: #{tpu_custom_call.1} parent=0
    #allocation4 [shape = 'u8[512]{0}', space=vmem, size = 0x400, scoped, tag = 'input window, operand 0, single buffered']
    #allocation5 [shape = 's32[1]{0}', space=sflag, size = 0x4, scoped, tag = 'scoped memory for tpu_custom_call.1']
    #allocation6 [shape = 's32[1]{0}', space=sflag, size = 0x4, scoped, tag = 'scoped memory for tpu_custom_call.1']
    #allocation7 [shape = 'u8[4096]{0}', space=vmem, size = 0x1000, scoped, tag = 'input window, operand 1, single buffered']
    #allocation8 [shape = 's32[1]{0}', space=sflag, size = 0x4, scoped, tag = 'scoped memory for tpu_custom_call.1']
    #allocation9 [shape = 'u8[4096]{0}', space=vmem, size = 0x1000, scoped, tag = 'output window, operand 0, single buffered']
    %7 = vsyncpa [#allocation5], 0
    %8 = vsyncpa [#allocation8], 0
    %9 = vsyncpa [#allocation6], 0
    // Predicated region
    $region2: #{tpu_custom_call.1} parent=1 // pred_check
      _
    $region3: #{tpu_custom_call.1} parent=1 // pred_check_branch
      %11 = sbr.rel (0) target = $region5
    $region4: #{tpu_custom_call.1} parent=1 // pred_region
      %13 = vsyncadd [#allocation5], 0
      %s15 = sshll.u32 %s0, 4
      %s16 = int_to_ptr.hbm [resolvable:$true] %s15
      %s17 = sshll.u32 [#allocation4], 4
      %s18 = int_to_ptr.vmem [resolvable:$true] %s17
      %20 = dma.hbm_to_vmem [thread:$0]  %s16, 16, %s18, [#allocation5]
    $region5: #{tpu_custom_call.1} parent=1 // pred_fallthru
      _
    // Predicated region
    $region6: #{tpu_custom_call.1} parent=1 // pred_check
      _
    $region7: #{tpu_custom_call.1} parent=1 // pred_check_branch
      %22 = sbr.rel (0) target = $region9
    $region8: #{tpu_custom_call.1} parent=1 // pred_region
      %24 = vsyncadd [#allocation8], 0
      %s26 = sshll.u32 %s1, 4
      %s27 = int_to_ptr.hbm [resolvable:$true] %s26
      %s28 = sshll.u32 [#allocation7], 4
      %s29 = int_to_ptr.vmem [resolvable:$true] %s28
      %31 = dma.hbm_to_vmem [thread:$0]  %s27, 128, %s29, [#allocation8]
    $region9: #{tpu_custom_call.1} parent=1 // pred_fallthru
      _
    // Predicated region
    $region10: #{tpu_custom_call.1} parent=1 // pred_check
      _
    $region11: #{tpu_custom_call.1} parent=1 // pred_check_branch
      %33 = sbr.rel (0) target = $region13
    $region12: #{tpu_custom_call.1} parent=1 // pred_region
      %35 = dma.done [#allocation5], 16
    $region13: #{tpu_custom_call.1} parent=1 // pred_fallthru
      _
    // Predicated region
    $region14: #{tpu_custom_call.1} parent=1 // pred_check
      _
    $region15: #{tpu_custom_call.1} parent=1 // pred_check_branch
      %37 = sbr.rel (0) target = $region17
    $region16: #{tpu_custom_call.1} parent=1 // pred_region
      %39 = dma.done [#allocation8], 128
    $region17: #{tpu_custom_call.1} parent=1 // pred_fallthru
      _
    %p40 = scmp.eq.s32.totalorder 0, 0
    // Predicated region
    $region18: #{tpu_custom_call.1} parent=1 // pred_check
      %p41 = pneg %p40
    $region19: #{tpu_custom_call.1} parent=1 // pred_check_branch
      %43 = sbr.rel (%p41) target = $region21
    $region20: #{tpu_custom_call.1} parent=1 // pred_region
      %44 = vst [vmem:[#allocation2] sm:$0xff] 0.0
      %vm45 = vcmask 7168
      %46 = vst.msk [vmem:[#allocation3] sm:$0xff] %vm45, 0.0
    $region21: #{tpu_custom_call.1} parent=1 // pred_fallthru
      _
    %v47 = vld [vmem:[#allocation4] sm:$0x1]
    %v48 = vlaneseq
    %v49 = vshrl.u32 %v48, 7
    %v50 = vperm.slane %v47, 0
    %vm51 = vcmp.eq.s32.totalorder %v49, %v50
    %v52 = vsel %vm51, 1, 0
    %v53 = vcvt.s32.f32 %v52
    %v54 = vld [vmem:[#allocation2] sm:$0xff]
    %v55 = vld [vmem:[#allocation7] sm:$0xff]
    %vm56 = vcmask 64512
    %v58 = vsel %vm56, %v53, 0
    %60 = vmatpush.msra.mxu0 0.0
    %61 = vmatpush.msra.mxu0 0.0
    %62 = vmatpush.msra.mxu0 0.0
    %63 = vmatpush.msra.mxu0 0.0
    %64 = vmatpush.msra.mxu0 0.0
    %65 = vmatpush.msra.mxu0 0.0
    %66 = vmatpush.msra.mxu0 0.0
    %67 = vmatpush.msra.mxu0 0.0
    %68 = vmatpush.msra.mxu0 0.0
    %69 = vmatpush.msra.mxu0 0.0
    %70 = vmatpush.msra.mxu0 0.0
    %71 = vmatpush.msra.mxu0 0.0
    %72 = vmatpush.msra.mxu0 0.0
    %73 = vmatpush.msra.mxu0 0.0
    %74 = vmatpush.msra.mxu0 0.0
    %75 = vmatpush.msra.mxu0 %v55
    %76 = vmatmul.f32.gmra.mxu0 %v58
    %v77 = vpop.f32.mrf.mxu0
    %v78 = vadd.f32 0.0, %v77
    %79 = vdwg.mxu0
    %v80 = vadd.f32 %v54, %v78
    %81 = vst [vmem:[#allocation2] sm:$0xff] %v80
    %v82 = vld [vmem:[#allocation3] sm:$0xff]
    %v83 = vsel %vm56, %v53, 0.0
    %84 = vadd.xlane.f32.xlu0 %v83
    %v85 = vpop.xlane.xlu0 %84
    %v86 = vadd.f32 %v82, %v85
    %vm87 = vcmask 7168
    %88 = vst.msk [vmem:[#allocation3] sm:$0xff] %vm87, %v86
    // Predicated region
    $region22: #{tpu_custom_call.1} parent=1 // pred_check
      %p89 = pneg %p40
    $region23: #{tpu_custom_call.1} parent=1 // pred_check_branch
      %91 = sbr.rel (%p89) target = $region25
    $region24: #{tpu_custom_call.1} parent=1 // pred_region
      %v92 = vld [vmem:[#allocation3] sm:$0xff]
      %v93 = vmax.f32 %v92, 1.0
      %v94 = vrcp.pop %v93
      %v95 = vmul.f32 %v93, %v94
      %v96 = vsub.f32 2.0, %v95
      %v97 = vmul.f32 %v94, %v96
      %v98 = vld [vmem:[#allocation2] sm:$0xff]
      %100 = vset.pattern.permute.xlu0 0
      %101 = vperm.xlu0 %100, %v97
      %v102 = vpop.permute.xlu0 %101
      %v104 = vmul.f32 %v98, %v102
      %105 = vst [vmem:[#allocation9] sm:$0xff] %v104
    $region25: #{tpu_custom_call.1} parent=1 // pred_fallthru
      _
    // Predicated region
    $region26: #{tpu_custom_call.1} parent=1 // pred_check
      _
    $region27: #{tpu_custom_call.1} parent=1 // pred_check_branch
      %107 = sbr.rel (0) target = $region29
    $region28: #{tpu_custom_call.1} parent=1 // pred_region
      %109 = vsyncadd [#allocation6], 0
      %s111 = sshll.u32 [#allocation9], 4
      %s112 = int_to_ptr.vmem [resolvable:$true] %s111
      %s113 = sshll.u32 %s2, 4
      %s114 = int_to_ptr.hbm [resolvable:$true] %s113
      %116 = dma.vmem_to_hbm [thread:$0]  %s112, 128, %s114, [#allocation6]
    $region29: #{tpu_custom_call.1} parent=1 // pred_fallthru
      _
    // Predicated region
    $region30: #{tpu_custom_call.1} parent=1 // pred_check
      _
    $region31: #{tpu_custom_call.1} parent=1 // pred_check_branch
      %118 = sbr.rel (0) target = $region33
    $region32: #{tpu_custom_call.1} parent=1 // pred_region
      %120 = dma.done [#allocation6], 128
    $region33: #{tpu_custom_call.1} parent=1 // pred_fallthru
      _
    %121 = vsyncpa [#allocation5], 1
    %122 = vsyncpa [#allocation8], 1
    %123 = vsyncpa [#allocation6], 1

</llo_original>
